<compile_context>
chip_gen: v7x
topology: tpu7x:2x2x1
jax: 0.10.0
libtpu: 0.0.40
codegen_flags: <defaults>
</compile_context>

<pallas_src>
import math

import jax
import jax.numpy as jnp
from jax.experimental import pallas as pl
from jax.experimental.pallas import tpu as pltpu


def _round_up(n, m):
    return (n + m - 1) // m * m


def _default_compute_dtype():
    # Perf review: on v5e default to bf16 MXU operands (f32 operands decompose
    # into multiple bf16 passes there and bf16 halves the streamed x bytes);
    # keep f32 as the default elsewhere.
    try:
        kind = jax.devices()[0].device_kind.lower()
    except Exception:
        return jnp.float32
    if "v5 lite" in kind or "v5e" in kind or "v5litepod" in kind:
        return jnp.bfloat16
    return jnp.float32


def _lipschitz_net_kernel(xT_ref, w1_ref, b1_ref, w2_ref, b2_ref, w3_ref, oT_ref):
    """Transposed dataflow: batch on lanes, features on sublanes.

    xT_ref : (in_dim_pad, TM)   streamed, lane-dense batch tile
    w1_ref : (H, in_dim_pad)    resident (PyTorch (out,in) layout, L1-normed, padded)
    b1_ref : (H, 1)             broadcast across lanes
    w2_ref : (H, H)             resident
    b2_ref : (H, 1)
    w3_ref : (1, H)             head row
    oT_ref : (1, TM)            lane-dense output row (scalar b3 added in wrapper)
    """
    tm = xT_ref.shape[1]
    H = w1_ref.shape[0]

    # Sublane-parity mask built once per grid step and reused by both GroupSort
    # activations (JAX does not CSE iota/broadcast).
    sub = jax.lax.broadcasted_iota(jnp.int32, (H, tm), 0)
    is_even = (sub & 1) == 0

    def groupsort2(h):
        # Partner of feature row j is row j ^ 1. Even rows look down (roll by
        # H-1 == roll by -1), odd rows look up (roll by +1). Rolls are sublane
        # rotations on the XLU (its slot is otherwise idle here); wrapped rows
        # are discarded by the parity select.
        partner = jnp.where(is_even,
                            pltpu.roll(h, shift=H - 1, axis=0),
                            pltpu.roll(h, shift=1, axis=0))
        # Even row of each pair gets min, odd row gets max (ascending sort).
        return jnp.where(is_even, jnp.minimum(h, partner),
                         jnp.maximum(h, partner))

    h = jnp.dot(w1_ref[...], xT_ref[...],
                preferred_element_type=jnp.float32) + b1_ref[...]
    h = groupsort2(h)
    h = jnp.dot(w2_ref[...], h.astype(w2_ref.dtype),
                preferred_element_type=jnp.float32) + b2_ref[...]
    h = groupsort2(h)
    # Head: (1, H) @ (H, TM) on the MXU -> lane-dense (1, TM) row, stored with
    # plain unmasked vst (no 1-lane-wide masked partial stores).
    y = jnp.dot(w3_ref[...], h.astype(w3_ref.dtype),
                preferred_element_type=jnp.float32)
    oT_ref[...] = y.astype(oT_ref.dtype)


def lipschitz_net_forward(x, params, lip_const=1.0, *, block_batch=2048,
                          compute_dtype=None):
    """params: list of (W, b) with W in PyTorch (out, in) layout; 2 hidden + 1 out."""
    assert len(params) == 3, "kernel is specialized to layer_dims of length 2"
    assert block_batch % 128 == 0 and block_batch > 0
    if compute_dtype is None:
        compute_dtype = _default_compute_dtype()
    n_layers = len(params)
    max_norm = float(lip_const) ** (1.0 / n_layers)

    # monotonenorm.direct_norm(kind='one', always_norm=False), hoisted out of
    # the kernel: data-independent, so it runs once here instead of per tile.
    def normed(w):  # (out, in) layout kept; L1 column-norm constrained
        w = jnp.asarray(w, jnp.float32)
        norms = jnp.sum(jnp.abs(w), axis=0)  # abs-sum per input column
        return w / jnp.maximum(norms / max_norm, 1.0)

    (w1, b1), (w2, b2), (w3, b3) = params
    w1n, w2n, w3n = normed(w1), normed(w2), normed(w3)
    b1 = jnp.asarray(b1, jnp.float32).reshape(-1, 1)
    b2 = jnp.asarray(b2, jnp.float32).reshape(-1, 1)
    b3 = jnp.asarray(b3, jnp.float32).reshape(())   # added in wrapper (scalar)

    h1, in_dim = w1n.shape
    h2 = w2n.shape[0]
    assert w2n.shape == (h2, h1)
    assert w3n.shape == (1, h2)
    assert h1 % 2 == 0 and h2 % 2 == 0

    # Transposed layout padding: features on sublanes only need multiples of 16
    # (covers bf16 packing). Zero-padded rows/columns contribute nothing and
    # GroupSort pairs never mix real with padded rows since h1/h2 are even.
    H = _round_up(max(h1, h2), 16)
    in_dim_pad = _round_up(in_dim, 16)
    w1p = jnp.zeros((H, in_dim_pad), jnp.float32).at[:h1, :in_dim].set(w1n)
    b1p = jnp.zeros((H, 1), jnp.float32).at[:h1].set(b1)
    w2p = jnp.zeros((H, H), jnp.float32).at[:h2, :h1].set(w2n)
    b2p = jnp.zeros((H, 1), jnp.float32).at[:h2].set(b2)
    w3p = jnp.zeros((1, H), jnp.float32).at[:, :h2].set(w3n)

    # MXU operands may be bf16 (peak MXU rate, half the streamed x bytes);
    # biases, GroupSort math and all accumulation stay f32.
    w1p = w1p.astype(compute_dtype)
    w2p = w2p.astype(compute_dtype)
    w3p = w3p.astype(compute_dtype)

    x = jnp.asarray(x)
    batch = x.shape[0]
    assert x.shape == (batch, in_dim)

    # Batch tile = lane dimension, multiple of 128 (lane-dense x tiles and
    # unmasked output stores). Cap it so the 1-D grid keeps >= 2 steps whenever
    # the batch allows it: v7x has 2 TensorCores and the "parallel" grid axis
    # is the only way this kernel shards across them.
    b128 = _round_up(batch, 128)
    tm = min(block_batch, b128)
    if b128 >= 2 * 128:
        tm = min(tm, _round_up(b128 // 2, 128))
    padded_b = _round_up(batch, tm)

    # x transposed once in the wrapper -> (in_dim_pad, padded_b); padded batch
    # columns are zero and sliced off after the call.
    xT = jnp.zeros((in_dim_pad, padded_b), compute_dtype)
    xT = xT.at[:in_dim, :batch].set(x.astype(compute_dtype).T)

    const = lambda i: (0, 0)   # weights/biases resident in VMEM for all steps
    out = pl.pallas_call(
        _lipschitz_net_kernel,
        out_shape=jax.ShapeDtypeStruct((1, padded_b), jnp.float32),
        grid_spec=pltpu.PrefetchScalarGridSpec(
            num_scalar_prefetch=0,
            grid=(padded_b // tm,),
            in_specs=[
                pl.BlockSpec((in_dim_pad, tm), lambda i: (0, i)),  # xT: streamed, lane-dense
                pl.BlockSpec((H, in_dim_pad), const),              # W1
                pl.BlockSpec((H, 1), const),                       # b1
                pl.BlockSpec((H, H), const),                       # W2
                pl.BlockSpec((H, 1), const),                       # b2
                pl.BlockSpec((1, H), const),                       # w3 head row
            ],
            out_specs=pl.BlockSpec((1, tm), lambda i: (0, i)),     # lane-dense output
        ),
        compiler_params=pltpu.CompilerParams(
            # Batch axis is embarrassingly parallel -> megacore sharding.
            # VMEM: resident weights are a few KiB; double-buffered xT tiles
            # (~in_dim_pad*tm*{2,4}B each) plus a handful of (H, tm) f32
            # intermediates stay far below 32 MiB even at tm=4096, so this
            # budget fits every generation (incl. v7x's 64 MiB physical VMEM).
            dimension_semantics=("parallel",),
            vmem_limit_bytes=32 * 1024 * 1024,
        ),
    )(xT, w1p, b1p, w2p, b2p, w3p)
    # b3 is a single scalar: adding it here avoids a (1,1) VMEM block padded to
    # a full (8,128) tile inside the kernel.
    return out[0, :batch].reshape(batch, 1) + b3


def _reference_forward(x, params, lip_const=1.0):
    """Pure-JAX reference of the PyTorch forward (for sanity check)."""
    n_layers = len(params)
    max_norm = float(lip_const) ** (1.0 / n_layers)
    h = jnp.asarray(x, jnp.float32)
    for i, (w, b) in enumerate(params):
        w = jnp.asarray(w, jnp.float32)
        norms = jnp.sum(jnp.abs(w), axis=0)                   # w: (out, in)
        wn = w / jnp.maximum(norms / max_norm, 1.0)
        h = h @ wn.T + jnp.asarray(b, jnp.float32)
        if i < n_layers - 1:
            bsz, d = h.shape
            h = jnp.sort(h.reshape(bsz, d // 2, 2), axis=-1).reshape(bsz, d)
    return h


if __name__ == "__main__":
    key = jax.random.PRNGKey(0)
    input_dim = 16
    layer_dims = [32, 32]
    lip_const = 1.0

    dims = [input_dim] + layer_dims + [1]
    params = []
    for i in range(len(dims) - 1):
        fan_in, fan_out = dims[i], dims[i + 1]
        key, kw, kb = jax.random.split(key, 3)
        bound = 1.0 / math.sqrt(fan_in)  # torch.nn.Linear default init bounds
        w = jax.random.uniform(kw, (fan_out, fan_in), jnp.float32, -bound, bound)
        b = jax.random.uniform(kb, (fan_out,), jnp.float32, -bound, bound)
        params.append((w, b))

    # Small batch, not a multiple of the tile -> exercises padding + 2-step grid.
    key, kx = jax.random.split(key)
    batch = 200
    x = jax.random.normal(kx, (batch, input_dim), jnp.float32)
    ref = _reference_forward(x, params, lip_const)

    # f32 MXU path: must match the reference tightly.
    out = jax.block_until_ready(
        lipschitz_net_forward(x, params, lip_const, compute_dtype=jnp.float32))
    assert out.shape == (batch, 1), out.shape
    assert jnp.allclose(out, ref, atol=1e-5, rtol=1e-5), "f32 kernel mismatch vs reference"

    # bf16 MXU path (f32 accumulation / activations): looser tolerance.
    out_bf16 = jax.block_until_ready(
        lipschitz_net_forward(x, params, lip_const, compute_dtype=jnp.bfloat16))
    assert out_bf16.shape == (batch, 1), out_bf16.shape
    assert jnp.allclose(out_bf16, ref, atol=2e-2, rtol=2e-2), "bf16 kernel mismatch vs reference"

    # Larger batch with the default (device-dependent) compute dtype: exercises
    # a multi-step grid, padded batch rows and the >=2-step tile cap.
    key, kx2 = jax.random.split(key)
    batch2 = 1000
    x2 = jax.random.normal(kx2, (batch2, input_dim), jnp.float32)
    ref2 = _reference_forward(x2, params, lip_const)
    out2 = jax.block_until_ready(
        lipschitz_net_forward(x2, params, lip_const, block_batch=512))
    assert out2.shape == (batch2, 1), out2.shape
    assert jnp.allclose(out2, ref2, atol=2e-2, rtol=2e-2), "default-dtype kernel mismatch vs reference"

    print("KERNEL_OK")
</pallas_src>

<mosaic_0001>
module attributes {stable_mosaic.version = 11 : i64} {
  func.func @_lipschitz_net_kernel(%arg0: i32, %arg1: memref<16x128xf32, #tpu.memory_space<vmem>>, %arg2: memref<32x16xf32, #tpu.memory_space<vmem>>, %arg3: memref<32x1xf32, #tpu.memory_space<vmem>>, %arg4: memref<32x32xf32, #tpu.memory_space<vmem>>, %arg5: memref<32x1xf32, #tpu.memory_space<vmem>>, %arg6: memref<1x32xf32, #tpu.memory_space<vmem>>, %arg7: memref<1x128xf32, #tpu.memory_space<vmem>>) attributes {dimension_semantics = [#tpu.dimension_semantics<parallel>], iteration_bounds = array<i64: 2>, scalar_prefetch = 0 : i64, scratch_operands = 0 : i64, tpu.core_type = #tpu.core_type<tc>, window_params = [{transform_indices = @transform_0, window_bounds = array<i64: 16, 128>}, {pipeline_mode = #tpu.pipeline_mode<synchronous>, transform_indices = @transform_1, window_bounds = array<i64: 32, 16>}, {pipeline_mode = #tpu.pipeline_mode<synchronous>, transform_indices = @transform_2, window_bounds = array<i64: 32, 1>}, {pipeline_mode = #tpu.pipeline_mode<synchronous>, transform_indices = @transform_3, window_bounds = array<i64: 32, 32>}, {pipeline_mode = #tpu.pipeline_mode<synchronous>, transform_indices = @transform_4, window_bounds = array<i64: 32, 1>}, {pipeline_mode = #tpu.pipeline_mode<synchronous>, transform_indices = @transform_5, window_bounds = array<i64: 1, 32>}, {transform_indices = @transform_6, window_bounds = array<i64: 1, 128>}]} {
    %0 = tpu.iota {dimensions = array<i32: 0>} : vector<32x128xi32>
    %c1_i32 = arith.constant 1 : i32
    %1 = vector.broadcast %c1_i32 : i32 to vector<32x128xi32>
    %2 = arith.andi %0, %1 : vector<32x128xi32>
    %c0_i32 = arith.constant 0 : i32
    %3 = vector.broadcast %c0_i32 : i32 to vector<32x128xi32>
    %4 = arith.cmpi eq, %2, %3 : vector<32x128xi32>
    %c0 = arith.constant 0 : index
    %c0_0 = arith.constant 0 : index
    %5 = vector.load %arg2[%c0, %c0_0] : memref<32x16xf32, #tpu.memory_space<vmem>>, vector<32x16xf32>
    %c0_1 = arith.constant 0 : index
    %c0_2 = arith.constant 0 : index
    %6 = vector.load %arg1[%c0_1, %c0_2] : memref<16x128xf32, #tpu.memory_space<vmem>>, vector<16x128xf32>
    %cst = arith.constant dense<0.000000e+00> : vector<32x128xf32>
    %7 = tpu.matmul %5, %6, %cst {dimension_numbers = #tpu.dot_dimension_numbers<[1], [0], [0], [1], [0, 0, 1, 1], [], []>} : vector<32x16xf32>, vector<16x128xf32>, vector<32x128xf32> -> vector<32x128xf32>
    %c0_3 = arith.constant 0 : index
    %c0_4 = arith.constant 0 : index
    %8 = vector.load %arg3[%c0_3, %c0_4] : memref<32x1xf32, #tpu.memory_space<vmem>>, vector<32x1xf32>
    %9 = vector.broadcast %8 : vector<32x1xf32> to vector<32x128xf32>
    %10 = arith.addf %7, %9 : vector<32x128xf32>
    %c31_i32 = arith.constant 31 : i32
    %11 = tpu.dynamic_rotate %10 by %c31_i32 dim 0 : vector<32x128xf32>, i32 -> vector<32x128xf32>
    %c1_i32_5 = arith.constant 1 : i32
    %12 = tpu.dynamic_rotate %10 by %c1_i32_5 dim 0 : vector<32x128xf32>, i32 -> vector<32x128xf32>
    %13 = arith.select %4, %11, %12 : vector<32x128xi1>, vector<32x128xf32>
    %14 = arith.minimumf %10, %13 : vector<32x128xf32>
    %15 = arith.maximumf %10, %13 : vector<32x128xf32>
    %16 = arith.select %4, %14, %15 : vector<32x128xi1>, vector<32x128xf32>
    %c0_6 = arith.constant 0 : index
    %c0_7 = arith.constant 0 : index
    %17 = vector.load %arg4[%c0_6, %c0_7] : memref<32x32xf32, #tpu.memory_space<vmem>>, vector<32x32xf32>
    %cst_8 = arith.constant dense<0.000000e+00> : vector<32x128xf32>
    %18 = tpu.matmul %17, %16, %cst_8 {dimension_numbers = #tpu.dot_dimension_numbers<[1], [0], [0], [1], [0, 0, 1, 1], [], []>} : vector<32x32xf32>, vector<32x128xf32>, vector<32x128xf32> -> vector<32x128xf32>
    %c0_9 = arith.constant 0 : index
    %c0_10 = arith.constant 0 : index
    %19 = vector.load %arg5[%c0_9, %c0_10] : memref<32x1xf32, #tpu.memory_space<vmem>>, vector<32x1xf32>
    %20 = vector.broadcast %19 : vector<32x1xf32> to vector<32x128xf32>
    %21 = arith.addf %18, %20 : vector<32x128xf32>
    %c31_i32_11 = arith.constant 31 : i32
    %22 = tpu.dynamic_rotate %21 by %c31_i32_11 dim 0 : vector<32x128xf32>, i32 -> vector<32x128xf32>
    %c1_i32_12 = arith.constant 1 : i32
    %23 = tpu.dynamic_rotate %21 by %c1_i32_12 dim 0 : vector<32x128xf32>, i32 -> vector<32x128xf32>
    %24 = arith.select %4, %22, %23 : vector<32x128xi1>, vector<32x128xf32>
    %25 = arith.minimumf %21, %24 : vector<32x128xf32>
    %26 = arith.maximumf %21, %24 : vector<32x128xf32>
    %27 = arith.select %4, %25, %26 : vector<32x128xi1>, vector<32x128xf32>
    %c0_13 = arith.constant 0 : index
    %c0_14 = arith.constant 0 : index
    %28 = vector.load %arg6[%c0_13, %c0_14] : memref<1x32xf32, #tpu.memory_space<vmem>>, vector<1x32xf32>
    %cst_15 = arith.constant dense<0.000000e+00> : vector<1x128xf32>
    %29 = tpu.matmul %28, %27, %cst_15 {dimension_numbers = #tpu.dot_dimension_numbers<[1], [0], [0], [1], [0, 0, 1, 1], [], []>} : vector<1x32xf32>, vector<32x128xf32>, vector<1x128xf32> -> vector<1x128xf32>
    %c0_16 = arith.constant 0 : index
    %c0_17 = arith.constant 0 : index
    %30 = vector.load %arg7[%c0_16, %c0_17] : memref<1x128xf32, #tpu.memory_space<vmem>>, vector<1x128xf32>
    tpu.vector_store %arg7[%c0_16, %c0_17], %29 {strides = array<i32>} : memref<1x128xf32, #tpu.memory_space<vmem>>, vector<1x128xf32>,
    return
  }
  func.func @transform_0(%arg0: i32) -> (i32, i32) {
    %c0_i32 = arith.constant 0 : i32
    %c0_i32_0 = arith.constant 0 : i32
    return %c0_i32, %arg0 : i32, i32
  }
  func.func @transform_1(%arg0: i32) -> (i32, i32) {
    %c0_i32 = arith.constant 0 : i32
    %c0_i32_0 = arith.constant 0 : i32
    %c0_i32_1 = arith.constant 0 : i32
    return %c0_i32, %c0_i32_0 : i32, i32
  }
  func.func @transform_2(%arg0: i32) -> (i32, i32) {
    %c0_i32 = arith.constant 0 : i32
    %c0_i32_0 = arith.constant 0 : i32
    %c0_i32_1 = arith.constant 0 : i32
    return %c0_i32, %c0_i32_0 : i32, i32
  }
  func.func @transform_3(%arg0: i32) -> (i32, i32) {
    %c0_i32 = arith.constant 0 : i32
    %c0_i32_0 = arith.constant 0 : i32
    %c0_i32_1 = arith.constant 0 : i32
    return %c0_i32, %c0_i32_0 : i32, i32
  }
  func.func @transform_4(%arg0: i32) -> (i32, i32) {
    %c0_i32 = arith.constant 0 : i32
    %c0_i32_0 = arith.constant 0 : i32
    %c0_i32_1 = arith.constant 0 : i32
    return %c0_i32, %c0_i32_0 : i32, i32
  }
  func.func @transform_5(%arg0: i32) -> (i32, i32) {
    %c0_i32 = arith.constant 0 : i32
    %c0_i32_0 = arith.constant 0 : i32
    %c0_i32_1 = arith.constant 0 : i32
    return %c0_i32, %c0_i32_0 : i32, i32
  }
  func.func @transform_6(%arg0: i32) -> (i32, i32) {
    %c0_i32 = arith.constant 0 : i32
    %c0_i32_0 = arith.constant 0 : i32
    return %c0_i32, %arg0 : i32, i32
  }
}

</mosaic_0001>

<llo_original>
// kernel: tpu_custom_call.1
$region0: #{tpu_custom_call.1}
  #allocation0 [shape = 'u32[]', space=smem, size = 0x4, offset = 0x4, fixed_abs, tag = 'smem constant byte address 0x4 - core index']
  #allocation1 [shape = 'u32[144,128]{1,0:T(1,128)}', space=vmem, size = 0x12000, scoped, tag = 'internal scratch']
  %s0 = inlined_call_operand.vmem [shape: f32[16,256], index: 0, kind: input, shape index: {}]
  %s1 = inlined_call_operand.vmem [shape: f32[32,16], index: 1, kind: input, shape index: {}]
  %s2 = inlined_call_operand.vmem [shape: f32[32,1], index: 2, kind: input, shape index: {}]
  %s3 = inlined_call_operand.vmem [shape: f32[32,32], index: 3, kind: input, shape index: {}]
  %s4 = inlined_call_operand.vmem [shape: f32[32,1], index: 4, kind: input, shape index: {}]
  %s5 = inlined_call_operand.vmem [shape: f32[1,32], index: 5, kind: input, shape index: {}]
  %s6 = inlined_call_operand.hbm [shape: f32[1,256], index: 6, kind: output, shape index: {}]
  %s7 = sld [smem:[#allocation0]]
  $region95: #{tpu_custom_call.1} parent=0
    _
  %s9 = ssub.s32 1, %s7
  %s10 = scalar_select 0, %s9, %s7
  $region1: #{tpu_custom_call.1} parent=0
    #allocation2 [shape = 'u8[16384]{0}', space=vmem, size = 0x4000, scoped, tag = 'input window, operand 0']
    #allocation3 [shape = 'u8[1024]{0}', space=vmem, size = 0x400, scoped, tag = 'output window, operand 0']
    #allocation4 [shape = 's32[2]{0}', space=sflag, size = 0x8, scoped, tag = 'scoped memory for tpu_custom_call.1']
    %11 = vsyncpa [#allocation4], 0
    %s12 = scalar_lea.sflag [#allocation4], 1
    %13 = vsyncpa %s12, 0
    loop: start=0, step=1, limit=4
    $region2: #{tpu_custom_call.1} parent=1 // loop_pre_header
      _
    $region3: #{tpu_custom_call.1} parent=1 // loop_header
      %s15 = sphi 0, %s19
      %p16 = scmp.ge.s32.totalorder %s15, 4
      %s25 = sphi 0, %s27
      %s28 = sphi 0, %s25
      %s29 = sphi 0, %s28
      %s45 = sphi 0, %s29
      %s49 = sphi 0, %s49
      %s51 = sphi 0, %s49
      %s52 = sphi 0, %s51
      %s66 = sphi 0, %s52
      %s70 = sphi 0, %s70
      %s72 = sphi 0, %s70
      %s73 = sphi 0, %s72
      %s87 = sphi 0, %s73
      %s91 = sphi 0, %s91
      %s93 = sphi 0, %s91
      %s94 = sphi 0, %s93
      %s108 = sphi 0, %s94
      %s112 = sphi 0, %s112
      %s114 = sphi 0, %s112
      %s115 = sphi 0, %s114
      %s129 = sphi 0, %s115
      %s133 = sphi 0, %s133
      %s135 = sphi 0, %s133
      %s136 = sphi 0, %s135
      %s150 = sphi 0, %s136
      %s156 = sphi 0, %s158
      %s159 = sphi 0, %s156
      %s160 = sphi 0, %s159
      %s176 = sphi 0, %s160
    $region4: #{tpu_custom_call.1} parent=1 // loop_header_branch
      %18 = sbr.rel (%p16) target = $region8
    $region5: #{tpu_custom_call.1} parent=1 // loop_body
      %s20 = ssub.s32 %s15, 1
      %s21 = ssub.s32 %s15, 2
      %s22 = sadd.s32 %s15, 1
      %s23 = ssub.s32 %s15, %s22
      %p24 = scmp.eq.s32.totalorder %s23, 0
      %s26 = sadd.s32 %s25, 1
      %s27 = scalar_select %p24, %s25, %s26
      %p30 = pneg %p24
      %p31 = scmp.eq.s32.totalorder %s15, 1
      %p32 = por %p30, %p31
      %p33 = scmp.ne.s32.totalorder %s25, %s28
      %p34 = scmp.eq.s32.totalorder %s15, 0
      %p35 = por %p33, %p34
      %p36 = scmp.ne.s32.totalorder %s25, %s28
      %p37 = scmp.eq.s32.totalorder %s20, 1
      %p38 = por %p36, %p37
      %p39 = scmp.ne.s32.totalorder %s28, %s29
      %p40 = scmp.eq.s32.totalorder %s20, 0
      %p41 = por %p39, %p40
      %p42 = scmp.ne.s32.totalorder %s28, %s29
      %p43 = scmp.eq.s32.totalorder %s21, 1
      %p44 = por %p42, %p43
      %p46 = scmp.ne.s32.totalorder %s29, %s45
      %p47 = scmp.eq.s32.totalorder %s21, 0
      %p48 = por %p46, %p47
      %s50 = sadd.s32 %s49, 1
      %p53 = scmp.eq.s32.totalorder %s15, 1
      %p54 = scmp.ne.s32.totalorder %s49, %s51
      %p55 = scmp.eq.s32.totalorder %s15, 0
      %p56 = por %p54, %p55
      %p57 = scmp.ne.s32.totalorder %s49, %s51
      %p58 = scmp.eq.s32.totalorder %s20, 1
      %p59 = por %p57, %p58
      %p60 = scmp.ne.s32.totalorder %s51, %s52
      %p61 = scmp.eq.s32.totalorder %s20, 0
      %p62 = por %p60, %p61
      %p63 = scmp.ne.s32.totalorder %s51, %s52
      %p64 = scmp.eq.s32.totalorder %s21, 1
      %p65 = por %p63, %p64
      %p67 = scmp.ne.s32.totalorder %s52, %s66
      %p68 = scmp.eq.s32.totalorder %s21, 0
      %p69 = por %p67, %p68
      %s71 = sadd.s32 %s70, 1
      %p74 = scmp.eq.s32.totalorder %s15, 1
      %p75 = scmp.ne.s32.totalorder %s70, %s72
      %p76 = scmp.eq.s32.totalorder %s15, 0
      %p77 = por %p75, %p76
      %p78 = scmp.ne.s32.totalorder %s70, %s72
      %p79 = scmp.eq.s32.totalorder %s20, 1
      %p80 = por %p78, %p79
      %p81 = scmp.ne.s32.totalorder %s72, %s73
      %p82 = scmp.eq.s32.totalorder %s20, 0
      %p83 = por %p81, %p82
      %p84 = scmp.ne.s32.totalorder %s72, %s73
      %p85 = scmp.eq.s32.totalorder %s21, 1
      %p86 = por %p84, %p85
      %p88 = scmp.ne.s32.totalorder %s73, %s87
      %p89 = scmp.eq.s32.totalorder %s21, 0
      %p90 = por %p88, %p89
      %s92 = sadd.s32 %s91, 1
      %p95 = scmp.eq.s32.totalorder %s15, 1
      %p96 = scmp.ne.s32.totalorder %s91, %s93
      %p97 = scmp.eq.s32.totalorder %s15, 0
      %p98 = por %p96, %p97
      %p99 = scmp.ne.s32.totalorder %s91, %s93
      %p100 = scmp.eq.s32.totalorder %s20, 1
      %p101 = por %p99, %p100
      %p102 = scmp.ne.s32.totalorder %s93, %s94
      %p103 = scmp.eq.s32.totalorder %s20, 0
      %p104 = por %p102, %p103
      %p105 = scmp.ne.s32.totalorder %s93, %s94
      %p106 = scmp.eq.s32.totalorder %s21, 1
      %p107 = por %p105, %p106
      %p109 = scmp.ne.s32.totalorder %s94, %s108
      %p110 = scmp.eq.s32.totalorder %s21, 0
      %p111 = por %p109, %p110
      %s113 = sadd.s32 %s112, 1
      %p116 = scmp.eq.s32.totalorder %s15, 1
      %p117 = scmp.ne.s32.totalorder %s112, %s114
      %p118 = scmp.eq.s32.totalorder %s15, 0
      %p119 = por %p117, %p118
      %p120 = scmp.ne.s32.totalorder %s112, %s114
      %p121 = scmp.eq.s32.totalorder %s20, 1
      %p122 = por %p120, %p121
      %p123 = scmp.ne.s32.totalorder %s114, %s115
      %p124 = scmp.eq.s32.totalorder %s20, 0
      %p125 = por %p123, %p124
      %p126 = scmp.ne.s32.totalorder %s114, %s115
      %p127 = scmp.eq.s32.totalorder %s21, 1
      %p128 = por %p126, %p127
      %p130 = scmp.ne.s32.totalorder %s115, %s129
      %p131 = scmp.eq.s32.totalorder %s21, 0
      %p132 = por %p130, %p131
      %s134 = sadd.s32 %s133, 1
      %p137 = scmp.eq.s32.totalorder %s15, 1
      %p138 = scmp.ne.s32.totalorder %s133, %s135
      %p139 = scmp.eq.s32.totalorder %s15, 0
      %p140 = por %p138, %p139
      %p141 = scmp.ne.s32.totalorder %s133, %s135
      %p142 = scmp.eq.s32.totalorder %s20, 1
      %p143 = por %p141, %p142
      %p144 = scmp.ne.s32.totalorder %s135, %s136
      %p145 = scmp.eq.s32.totalorder %s20, 0
      %p146 = por %p144, %p145
      %p147 = scmp.ne.s32.totalorder %s135, %s136
      %p148 = scmp.eq.s32.totalorder %s21, 1
      %p149 = por %p147, %p148
      %p151 = scmp.ne.s32.totalorder %s136, %s150
      %p152 = scmp.eq.s32.totalorder %s21, 0
      %p153 = por %p151, %p152
      %s154 = ssub.s32 %s15, %s22
      %p155 = scmp.eq.s32.totalorder %s154, 0
      %s157 = sadd.s32 %s156, 1
      %s158 = scalar_select %p155, %s156, %s157
      %p161 = pneg %p155
      %p162 = scmp.eq.s32.totalorder %s15, 1
      %p163 = por %p161, %p162
      %p164 = scmp.ne.s32.totalorder %s156, %s159
      %p165 = scmp.eq.s32.totalorder %s15, 0
      %p166 = por %p164, %p165
      %p167 = scmp.ne.s32.totalorder %s156, %s159
      %p168 = scmp.eq.s32.totalorder %s20, 1
      %p169 = por %p167, %p168
      %p170 = scmp.ne.s32.totalorder %s159, %s160
      %p171 = scmp.eq.s32.totalorder %s20, 0
      %p172 = por %p170, %p171
      %p173 = scmp.ne.s32.totalorder %s159, %s160
      %p174 = scmp.eq.s32.totalorder %s21, 1
      %p175 = por %p173, %p174
      %p177 = scmp.ne.s32.totalorder %s160, %s176
      %p178 = scmp.eq.s32.totalorder %s21, 0
      %p179 = por %p177, %p178
      %p180 = scmp.le.s32.totalorder 1, %s15
      %p181 = scmp.lt.s32.totalorder %s15, 3
      %p182 = pnand %p180, %p181
      %p183 = pneg %p182
      // Predicated region
      $region9: #{tpu_custom_call.1} parent=5 // pred_check
        _
      $region10: #{tpu_custom_call.1} parent=5 // pred_check_branch
        %185 = sbr.rel (%p182) target = $region12
      $region11: #{tpu_custom_call.1} parent=5 // pred_region
        %s186 = ssub.s32 %s15, 1
        // Predicated region
        $region13: #{tpu_custom_call.1} parent=11 // pred_check
          %p187 = pneg %p62
        $region14: #{tpu_custom_call.1} parent=11 // pred_check_branch
          %189 = sbr.rel (%p187) target = $region16
        $region15: #{tpu_custom_call.1} parent=11 // pred_region
          _
        $region16: #{tpu_custom_call.1} parent=11 // pred_fallthru
          _
        // Predicated region
        $region17: #{tpu_custom_call.1} parent=11 // pred_check
          %p190 = pneg %p83
        $region18: #{tpu_custom_call.1} parent=11 // pred_check_branch
          %192 = sbr.rel (%p190) target = $region20
        $region19: #{tpu_custom_call.1} parent=11 // pred_region
          _
        $region20: #{tpu_custom_call.1} parent=11 // pred_fallthru
          _
        // Predicated region
        $region21: #{tpu_custom_call.1} parent=11 // pred_check
          %p193 = pneg %p104
        $region22: #{tpu_custom_call.1} parent=11 // pred_check_branch
          %195 = sbr.rel (%p193) target = $region24
        $region23: #{tpu_custom_call.1} parent=11 // pred_region
          _
        $region24: #{tpu_custom_call.1} parent=11 // pred_fallthru
          _
        // Predicated region
        $region25: #{tpu_custom_call.1} parent=11 // pred_check
          %p196 = pneg %p125
        $region26: #{tpu_custom_call.1} parent=11 // pred_check_branch
          %198 = sbr.rel (%p196) target = $region28
        $region27: #{tpu_custom_call.1} parent=11 // pred_region
          _
        $region28: #{tpu_custom_call.1} parent=11 // pred_fallthru
          _
        // Predicated region
        $region29: #{tpu_custom_call.1} parent=11 // pred_check
          %p199 = pneg %p146
        $region30: #{tpu_custom_call.1} parent=11 // pred_check_branch
          %201 = sbr.rel (%p199) target = $region32
        $region31: #{tpu_custom_call.1} parent=11 // pred_region
          _
        $region32: #{tpu_custom_call.1} parent=11 // pred_fallthru
          _
      $region12: #{tpu_custom_call.1} parent=5 // pred_fallthru
        _
      %p202 = scmp.lt.s32.totalorder %s15, 2
      // Predicated region
      $region33: #{tpu_custom_call.1} parent=5 // pred_check
        %p203 = pneg %p202
      $region34: #{tpu_custom_call.1} parent=5 // pred_check_branch
        %205 = sbr.rel (%p203) target = $region36
      $region35: #{tpu_custom_call.1} parent=5 // pred_region
        // Predicated region
        $region37: #{tpu_custom_call.1} parent=35 // pred_check
          %p206 = pneg %p35
        $region38: #{tpu_custom_call.1} parent=35 // pred_check_branch
          %208 = sbr.rel (%p206) target = $region40
        $region39: #{tpu_custom_call.1} parent=35 // pred_region
          %s209 = sand.u32 %s25, 1
          %s210 = sand.u32 %s25, 1
          %s211 = smul.addr %s210, 16
          %s212 = scalar_lea.vmem [#allocation2], %s211
          %s213 = smul.addr %s15, 8
          %s214 = scalar_lea.vmem %s0, %s213
          // Predicated region
          $region41: #{tpu_custom_call.1} parent=39 // pred_check
            _
          $region42: #{tpu_custom_call.1} parent=39 // pred_check_branch
            %216 = sbr.rel (0) target = $region44
          $region43: #{tpu_custom_call.1} parent=39 // pred_region
            // Predicated region
            $region45: #{tpu_custom_call.1} parent=43 // pred_check
              _
            $region46: #{tpu_custom_call.1} parent=43 // pred_check_branch
              %218 = sbr.rel (0) target = $region48
            $region47: #{tpu_custom_call.1} parent=43 // pred_region
              // Predicated region
              $region60: #{tpu_custom_call.1} parent=47 // pred_check
                _
              $region61: #{tpu_custom_call.1} parent=47 // pred_check_branch
                %235 = sbr.rel (0) target = $region63
              $region62: #{tpu_custom_call.1} parent=47 // pred_region
                loop: start=0, step=1, limit=1
                $region64: #{tpu_custom_call.1} parent=62 // loop_pre_header
                  _
                $region65: #{tpu_custom_call.1} parent=62 // loop_header
                  %s237 = sphi 0, %s241
                  %p238 = scmp.ge.s32.totalorder %s237, 1
                  %s242 = sphi %s214, %s214
                  %s243 = sphi %s212, %s212
                $region66: #{tpu_custom_call.1} parent=62 // loop_header_branch
                  %240 = sbr.rel (%p238) target = $region70
                $region67: #{tpu_custom_call.1} parent=62 // loop_body
                  %v244 = vld [vmem:[%s242] sm:$0xff]
                  %245 = vst [vmem:[%s243] sm:$0xff] %v244
                  %v246 = vld [vmem:[%s242 + $0x10] sm:$0xff]
                  %247 = vst [vmem:[%s243 + $0x8] sm:$0xff] %v246
                $region68: #{tpu_custom_call.1} parent=62 // loop_footer
                  %s241 = sadd.s32 1, %s237
                $region69: #{tpu_custom_call.1} parent=62 // loop_footer_branch
                  %236 = sbr.rel target = $region65
                $region70: #{tpu_custom_call.1} parent=62 // loop_exit
                  _
              $region63: #{tpu_custom_call.1} parent=47 // pred_fallthru
                _
              // Predicated region
              $region71: #{tpu_custom_call.1} parent=47 // pred_check
                _
              $region72: #{tpu_custom_call.1} parent=47 // pred_check_branch
                %249 = sbr.rel target = $region74
              $region73: #{tpu_custom_call.1} parent=47 // pred_region
                _
              $region74: #{tpu_custom_call.1} parent=47 // pred_fallthru
                _
            $region48: #{tpu_custom_call.1} parent=43 // pred_fallthru
              _
            // Predicated region
            $region49: #{tpu_custom_call.1} parent=43 // pred_check
              _
            $region50: #{tpu_custom_call.1} parent=43 // pred_check_branch
              %220 = sbr.rel target = $region52
            $region51: #{tpu_custom_call.1} parent=43 // pred_region
              loop: start=0, step=1, limit=1
              $region53: #{tpu_custom_call.1} parent=51 // loop_pre_header
                _
              $region54: #{tpu_custom_call.1} parent=51 // loop_header
                %s223 = sphi 0, %s227
                %p224 = scmp.ge.s32.totalorder %s223, 1
                %s228 = sphi %s214, %s214
                %s229 = sphi %s212, %s212
              $region55: #{tpu_custom_call.1} parent=51 // loop_header_branch
                %226 = sbr.rel (%p224) target = $region59
              $region56: #{tpu_custom_call.1} parent=51 // loop_body
                %v230 = vld [vmem:[%s228] sm:$0xff]
                %231 = vst [vmem:[%s229] sm:$0xff] %v230
                %v232 = vld [vmem:[%s228 + $0x10] sm:$0xff]
                %233 = vst [vmem:[%s229 + $0x8] sm:$0xff] %v232
              $region57: #{tpu_custom_call.1} parent=51 // loop_footer
                %s227 = sadd.s32 1, %s223
              $region58: #{tpu_custom_call.1} parent=51 // loop_footer_branch
                %222 = sbr.rel target = $region54
              $region59: #{tpu_custom_call.1} parent=51 // loop_exit
                _
            $region52: #{tpu_custom_call.1} parent=43 // pred_fallthru
              _
          $region44: #{tpu_custom_call.1} parent=39 // pred_fallthru
            _
          %250 = vnop
        $region40: #{tpu_custom_call.1} parent=35 // pred_fallthru
          _
      $region36: #{tpu_custom_call.1} parent=5 // pred_fallthru
        _
      %p251 = scmp.le.s32.totalorder 1, %s15
      %p252 = scmp.lt.s32.totalorder %s15, 3
      %p253 = pnand %p251, %p252
      %p254 = pneg %p253
      // Predicated region
      $region75: #{tpu_custom_call.1} parent=5 // pred_check
        _
      $region76: #{tpu_custom_call.1} parent=5 // pred_check_branch
        %256 = sbr.rel (%p253) target = $region78
      $region77: #{tpu_custom_call.1} parent=5 // pred_region
        %s257 = ssub.s32 %s15, 1
        %s258 = sand.u32 %s28, 1
        %s259 = sand.u32 %s28, 1
        %s260 = smul.addr %s259, 16
        %s261 = scalar_lea.vmem [#allocation2], %s260
        // Predicated region
        $region79: #{tpu_custom_call.1} parent=77 // pred_check
          %p262 = pneg %p41
        $region80: #{tpu_custom_call.1} parent=77 // pred_check_branch
          %264 = sbr.rel (%p262) target = $region82
        $region81: #{tpu_custom_call.1} parent=77 // pred_region
          _
        $region82: #{tpu_custom_call.1} parent=77 // pred_fallthru
          _
        %s265 = sand.u32 %s28, 1
        %s266 = sand.u32 %s28, 1
        %s267 = smul.addr %s266, 16
        %s268 = scalar_lea.vmem [#allocation2], %s267
        %p269 = pneg %p41
        %p270 = pneg %p38
        %p271 = pneg %p62
        %p272 = pneg %p59
        %p273 = pneg %p83
        %p274 = pneg %p80
        %p275 = pneg %p104
        %p276 = pneg %p101
        %p277 = pneg %p125
        %p278 = pneg %p122
        %p279 = pneg %p146
        %p280 = pneg %p143
        %p281 = pneg %p172
        %p282 = pneg %p169
        %s283 = sand.u32 %s159, 1
        %s284 = scalar_lea.sflag [#allocation4], %s283
        %s285 = sand.u32 %s159, 1
        %s286 = scalar_lea.vmem [#allocation3], %s285
        %v287 = vlaneseq
        %v288 = vshrl.u32 %v287, 7
        %v289 = vadd.s32 %v288, 8
        %v290 = vadd.s32 %v288, 16
        %v291 = vadd.s32 %v288, 24
        %v292 = vand.u32 %v288, 1
        %v293 = vand.u32 %v289, 1
        %v294 = vand.u32 %v290, 1
        %v295 = vand.u32 %v291, 1
        %vm296 = vcmp.eq.s32.totalorder %v292, 0
        %vm297 = vcmp.eq.s32.totalorder %v293, 0
        %vm298 = vcmp.eq.s32.totalorder %v294, 0
        %vm299 = vcmp.eq.s32.totalorder %v295, 0
        %v300 = vld [vmem:[%s1] sm:$0xff]
        %v301 = vld [vmem:[%s1 + $0x8] sm:$0xff]
        %v302 = vld [vmem:[%s1 + $0x10] sm:$0xff]
        %v303 = vld [vmem:[%s1 + $0x18] sm:$0xff]
        %v304 = vld [vmem:[%s261] sm:$0xff]
        %v305 = vld [vmem:[%s261 + $0x8] sm:$0xff]
        %v306 = vld [vmem:[%s2] sm:$0xff]
        %v307 = vld [vmem:[%s2 + $0x8] sm:$0xff]
        %v308 = vld [vmem:[%s2 + $0x10] sm:$0xff]
        %v309 = vld [vmem:[%s2 + $0x18] sm:$0xff]
        %311 = vset.pattern.permute.xlu0 0
        %312 = vperm.xlu0 %311, %v306
        %v313 = vpop.permute.xlu0 %312
        %316 = vset.pattern.permute.xlu0 0
        %317 = vperm.xlu0 %316, %v307
        %v318 = vpop.permute.xlu0 %317
        %321 = vset.pattern.permute.xlu0 0
        %322 = vperm.xlu0 %321, %v308
        %v323 = vpop.permute.xlu0 %322
        %326 = vset.pattern.permute.xlu0 0
        %327 = vperm.xlu0 %326, %v309
        %v328 = vpop.permute.xlu0 %327
        %vm330 = vcmask 130048
        %v332 = vsel %vm330, %v300, 0
        %v335 = vsel %vm330, %v301, 0
        %v338 = vsel %vm330, %v302, 0
        %v341 = vsel %vm330, %v303, 0
        %343 = vmatprep.subr.mxu0 0.0
        %344 = vmatpush1.msra.mxu0 %v304
        %345 = vmatprep.subr.mxu0 0.0
        %346 = vmatpush1.msra.mxu0 %v305
        %347 = vmatprep.subr.mxu0 0.0
        %348 = vmatpush1.msra.mxu0 0.0
        %349 = vmatprep.subr.mxu0 0.0
        %350 = vmatpush1.msra.mxu0 0.0
        %351 = vmatprep.subr.mxu0 0.0
        %352 = vmatpush1.msra.mxu0 0.0
        %353 = vmatprep.subr.mxu0 0.0
        %354 = vmatpush1.msra.mxu0 0.0
        %355 = vmatprep.subr.mxu0 0.0
        %356 = vmatpush1.msra.mxu0 0.0
        %357 = vmatprep.subr.mxu0 0.0
        %358 = vmatpush1.msra.mxu0 0.0
        %359 = vmatprep.subr.mxu0 0.0
        %360 = vmatpush1.msra.mxu0 0.0
        %361 = vmatprep.subr.mxu0 0.0
        %362 = vmatpush1.msra.mxu0 0.0
        %363 = vmatprep.subr.mxu0 0.0
        %364 = vmatpush1.msra.mxu0 0.0
        %365 = vmatprep.subr.mxu0 0.0
        %366 = vmatpush1.msra.mxu0 0.0
        %367 = vmatprep.subr.mxu0 0.0
        %368 = vmatpush1.msra.mxu0 0.0
        %369 = vmatprep.subr.mxu0 0.0
        %370 = vmatpush1.msra.mxu0 0.0
        %371 = vmatprep.subr.mxu0 0.0
        %372 = vmatpush1.msra.mxu0 0.0
        %373 = vmatprep.subr.mxu0 0.0
        %374 = vmatpush1.msra.mxu0 0.0
        %375 = vmatprep.subr.mxu0 0.0
        %376 = vmatpush1.msra.mxu0 0.0
        %377 = vmatprep.subr.mxu0 0.0
        %378 = vmatpush1.msra.mxu0 0.0
        %379 = vmatprep.subr.mxu0 0.0
        %380 = vmatpush1.msra.mxu0 0.0
        %381 = vmatprep.subr.mxu0 0.0
        %382 = vmatpush1.msra.mxu0 0.0
        %383 = vmatprep.subr.mxu0 0.0
        %384 = vmatpush1.msra.mxu0 0.0
        %385 = vmatprep.subr.mxu0 0.0
        %386 = vmatpush1.msra.mxu0 0.0
        %387 = vmatprep.subr.mxu0 0.0
        %388 = vmatpush1.msra.mxu0 0.0
        %389 = vmatprep.subr.mxu0 0.0
        %390 = vmatpush1.msra.mxu0 0.0
        %391 = vmatprep.subr.mxu0 0.0
        %392 = vmatpush1.msra.mxu0 0.0
        %393 = vmatprep.subr.mxu0 0.0
        %394 = vmatpush1.msra.mxu0 0.0
        %395 = vmatprep.subr.mxu0 0.0
        %396 = vmatpush1.msra.mxu0 0.0
        %397 = vmatprep.subr.mxu0 0.0
        %398 = vmatpush1.msra.mxu0 0.0
        %399 = vmatprep.subr.mxu0 0.0
        %400 = vmatpush1.msra.mxu0 0.0
        %401 = vmatprep.subr.mxu0 0.0
        %402 = vmatpush1.msra.mxu0 0.0
        %403 = vmatprep.subr.mxu0 0.0
        %404 = vmatpush1.msra.mxu0 0.0
        %405 = vmatprep.subr.mxu0 0.0
        %406 = vmatpush1.msra.mxu0 0.0
        %407 = vmatprep.mubr.f32.mxu0 0.0
        %408 = vmatmul.mubr.f32.gmra.mrb[0].mxu0 %v332
        %v409 = vpop.f32.mrb[0].mxu0
        %v410 = vadd.f32 %v313, %v409
        %v411 = vpop.f32.mrb[0].mxu0
        %412 = vmatprep.mubr.f32.mxu0 0.0
        %413 = vmatmul.mubr.f32.gmra.mrb[0].mxu0 %v335
        %v414 = vpop.f32.mrb[0].mxu0
        %v415 = vadd.f32 %v318, %v414
        %v416 = vpop.f32.mrb[0].mxu0
        %417 = vmatprep.mubr.f32.mxu0 0.0
        %418 = vmatmul.mubr.f32.gmra.mrb[0].mxu0 %v338
        %v419 = vpop.f32.mrb[0].mxu0
        %v420 = vadd.f32 %v323, %v419
        %v421 = vpop.f32.mrb[0].mxu0
        %422 = vmatprep.mubr.f32.mxu0 0.0
        %423 = vmatmul.mubr.f32.gmra.mrb[0].mxu0 %v341
        %v424 = vpop.f32.mrb[0].mxu0
        %v425 = vadd.f32 %v328, %v424
        %v426 = vpop.f32.mrb[0].mxu0
        %427 = vdwg.mxu0
        %v428 = vrot.slane %v410, 1
        %v429 = vrot.slane %v415, 1
        %v430 = vrot.slane %v420, 1
        %v431 = vrot.slane %v425, 1
        %vm432 = vcmp.lt.s32.totalorder %v288, 7
        %v433 = vsel %vm432, %v430, %v431
        %v434 = vsel %vm432, %v429, %v430
        %v435 = vsel %vm432, %v428, %v429
        %v436 = vsel %vm432, %v431, %v428
        %v437 = vrot.slane %v410, 7
        %v438 = vrot.slane %v415, 7
        %v439 = vrot.slane %v420, 7
        %v440 = vrot.slane %v425, 7
        %vm441 = vcmp.lt.s32.totalorder %v288, 1
        %v442 = vsel %vm441, %v439, %v440
        %v443 = vsel %vm441, %v438, %v439
        %v444 = vsel %vm441, %v437, %v438
        %v445 = vsel %vm441, %v440, %v437
        %v446 = vsel %vm296, %v435, %v445
        %v447 = vsel %vm297, %v434, %v444
        %v448 = vsel %vm298, %v433, %v443
        %v449 = vsel %vm299, %v436, %v442
        %v450 = vmin.f32 %v410, %v446
        %v451 = vmin.f32 %v415, %v447
        %v452 = vmin.f32 %v420, %v448
        %v453 = vmin.f32 %v425, %v449
        %v454 = vmax.f32 %v410, %v446
        %v455 = vmax.f32 %v415, %v447
        %v456 = vmax.f32 %v420, %v448
        %v457 = vmax.f32 %v425, %v449
        %v458 = vsel %vm296, %v450, %v454
        %v459 = vsel %vm297, %v451, %v455
        %v460 = vsel %vm298, %v452, %v456
        %v461 = vsel %vm299, %v453, %v457
        %v462 = vld [vmem:[%s3] sm:$0xff]
        %v463 = vld [vmem:[%s3 + $0x8] sm:$0xff]
        %v464 = vld [vmem:[%s3 + $0x10] sm:$0xff]
        %v465 = vld [vmem:[%s3 + $0x18] sm:$0xff]
        %v466 = vld [vmem:[%s4] sm:$0xff]
        %v467 = vld [vmem:[%s4 + $0x8] sm:$0xff]
        %v468 = vld [vmem:[%s4 + $0x10] sm:$0xff]
        %v469 = vld [vmem:[%s4 + $0x18] sm:$0xff]
        %471 = vset.pattern.permute.xlu0 0
        %472 = vperm.xlu0 %471, %v466
        %v473 = vpop.permute.xlu0 %472
        %476 = vset.pattern.permute.xlu0 0
        %477 = vperm.xlu0 %476, %v467
        %v478 = vpop.permute.xlu0 %477
        %481 = vset.pattern.permute.xlu0 0
        %482 = vperm.xlu0 %481, %v468
        %v483 = vpop.permute.xlu0 %482
        %486 = vset.pattern.permute.xlu0 0
        %487 = vperm.xlu0 %486, %v469
        %v488 = vpop.permute.xlu0 %487
        %vm490 = vcmask 261120
        %v492 = vsel %vm490, %v462, 0
        %v495 = vsel %vm490, %v463, 0
        %v498 = vsel %vm490, %v464, 0
        %v501 = vsel %vm490, %v465, 0
        %503 = vmatprep.subr.mxu0 0.0
        %504 = vmatpush1.msra.mxu0 %v458
        %505 = vmatprep.subr.mxu0 0.0
        %506 = vmatpush1.msra.mxu0 %v459
        %507 = vmatprep.subr.mxu0 0.0
        %508 = vmatpush1.msra.mxu0 %v460
        %509 = vmatprep.subr.mxu0 0.0
        %510 = vmatpush1.msra.mxu0 %v461
        %511 = vmatprep.subr.mxu0 0.0
        %512 = vmatpush1.msra.mxu0 0.0
        %513 = vmatprep.subr.mxu0 0.0
        %514 = vmatpush1.msra.mxu0 0.0
        %515 = vmatprep.subr.mxu0 0.0
        %516 = vmatpush1.msra.mxu0 0.0
        %517 = vmatprep.subr.mxu0 0.0
        %518 = vmatpush1.msra.mxu0 0.0
        %519 = vmatprep.subr.mxu0 0.0
        %520 = vmatpush1.msra.mxu0 0.0
        %521 = vmatprep.subr.mxu0 0.0
        %522 = vmatpush1.msra.mxu0 0.0
        %523 = vmatprep.subr.mxu0 0.0
        %524 = vmatpush1.msra.mxu0 0.0
        %525 = vmatprep.subr.mxu0 0.0
        %526 = vmatpush1.msra.mxu0 0.0
        %527 = vmatprep.subr.mxu0 0.0
        %528 = vmatpush1.msra.mxu0 0.0
        %529 = vmatprep.subr.mxu0 0.0
        %530 = vmatpush1.msra.mxu0 0.0
        %531 = vmatprep.subr.mxu0 0.0
        %532 = vmatpush1.msra.mxu0 0.0
        %533 = vmatprep.subr.mxu0 0.0
        %534 = vmatpush1.msra.mxu0 0.0
        %535 = vmatprep.subr.mxu0 0.0
        %536 = vmatpush1.msra.mxu0 0.0
        %537 = vmatprep.subr.mxu0 0.0
        %538 = vmatpush1.msra.mxu0 0.0
        %539 = vmatprep.subr.mxu0 0.0
        %540 = vmatpush1.msra.mxu0 0.0
        %541 = vmatprep.subr.mxu0 0.0
        %542 = vmatpush1.msra.mxu0 0.0
        %543 = vmatprep.subr.mxu0 0.0
        %544 = vmatpush1.msra.mxu0 0.0
        %545 = vmatprep.subr.mxu0 0.0
        %546 = vmatpush1.msra.mxu0 0.0
        %547 = vmatprep.subr.mxu0 0.0
        %548 = vmatpush1.msra.mxu0 0.0
        %549 = vmatprep.subr.mxu0 0.0
        %550 = vmatpush1.msra.mxu0 0.0
        %551 = vmatprep.subr.mxu0 0.0
        %552 = vmatpush1.msra.mxu0 0.0
        %553 = vmatprep.subr.mxu0 0.0
        %554 = vmatpush1.msra.mxu0 0.0
        %555 = vmatprep.subr.mxu0 0.0
        %556 = vmatpush1.msra.mxu0 0.0
        %557 = vmatprep.subr.mxu0 0.0
        %558 = vmatpush1.msra.mxu0 0.0
        %559 = vmatprep.subr.mxu0 0.0
        %560 = vmatpush1.msra.mxu0 0.0
        %561 = vmatprep.subr.mxu0 0.0
        %562 = vmatpush1.msra.mxu0 0.0
        %563 = vmatprep.subr.mxu0 0.0
        %564 = vmatpush1.msra.mxu0 0.0
        %565 = vmatprep.subr.mxu0 0.0
        %566 = vmatpush1.msra.mxu0 0.0
        %567 = vmatprep.mubr.f32.mxu0 0.0
        %568 = vmatmul.mubr.f32.gmra.mrb[0].mxu0 %v492
        %v569 = vpop.f32.mrb[0].mxu0
        %v570 = vadd.f32 %v473, %v569
        %v571 = vpop.f32.mrb[0].mxu0
        %572 = vmatprep.mubr.f32.mxu0 0.0
        %573 = vmatmul.mubr.f32.gmra.mrb[0].mxu0 %v495
        %v574 = vpop.f32.mrb[0].mxu0
        %v575 = vadd.f32 %v478, %v574
        %v576 = vpop.f32.mrb[0].mxu0
        %577 = vmatprep.mubr.f32.mxu0 0.0
        %578 = vmatmul.mubr.f32.gmra.mrb[0].mxu0 %v498
        %v579 = vpop.f32.mrb[0].mxu0
        %v580 = vadd.f32 %v483, %v579
        %v581 = vpop.f32.mrb[0].mxu0
        %582 = vmatprep.mubr.f32.mxu0 0.0
        %583 = vmatmul.mubr.f32.gmra.mrb[0].mxu0 %v501
        %v584 = vpop.f32.mrb[0].mxu0
        %v585 = vadd.f32 %v488, %v584
        %v586 = vpop.f32.mrb[0].mxu0
        %587 = vdwg.mxu0
        %v588 = vrot.slane %v570, 1
        %v589 = vrot.slane %v575, 1
        %v590 = vrot.slane %v580, 1
        %v591 = vrot.slane %v585, 1
        %v592 = vsel %vm432, %v590, %v591
        %v593 = vsel %vm432, %v589, %v590
        %v594 = vsel %vm432, %v588, %v589
        %v595 = vsel %vm432, %v591, %v588
        %v596 = vrot.slane %v570, 7
        %v597 = vrot.slane %v575, 7
        %v598 = vrot.slane %v580, 7
        %v599 = vrot.slane %v585, 7
        %v600 = vsel %vm441, %v598, %v599
        %v601 = vsel %vm441, %v597, %v598
        %v602 = vsel %vm441, %v596, %v597
        %v603 = vsel %vm441, %v599, %v596
        %v604 = vsel %vm296, %v594, %v603
        %v605 = vsel %vm297, %v593, %v602
        %v606 = vsel %vm298, %v592, %v601
        %v607 = vsel %vm299, %v595, %v600
        %v608 = vmin.f32 %v570, %v604
        %v609 = vmin.f32 %v575, %v605
        %v610 = vmin.f32 %v580, %v606
        %v611 = vmin.f32 %v585, %v607
        %v612 = vmax.f32 %v570, %v604
        %v613 = vmax.f32 %v575, %v605
        %v614 = vmax.f32 %v580, %v606
        %v615 = vmax.f32 %v585, %v607
        %v616 = vsel %vm296, %v608, %v612
        %v617 = vsel %vm297, %v609, %v613
        %v618 = vsel %vm298, %v610, %v614
        %v619 = vsel %vm299, %v611, %v615
        %v620 = vld [vmem:[%s5] sm:$0x1]
        %v622 = vsel %vm490, %v620, 0
        %624 = vmatprep.subr.mxu0 0.0
        %625 = vmatpush1.msra.mxu0 %v616
        %626 = vmatprep.subr.mxu0 0.0
        %627 = vmatpush1.msra.mxu0 %v617
        %628 = vmatprep.subr.mxu0 0.0
        %629 = vmatpush1.msra.mxu0 %v618
        %630 = vmatprep.subr.mxu0 0.0
        %631 = vmatpush1.msra.mxu0 %v619
        %632 = vmatprep.subr.mxu0 0.0
        %633 = vmatpush1.msra.mxu0 0.0
        %634 = vmatprep.subr.mxu0 0.0
        %635 = vmatpush1.msra.mxu0 0.0
        %636 = vmatprep.subr.mxu0 0.0
        %637 = vmatpush1.msra.mxu0 0.0
        %638 = vmatprep.subr.mxu0 0.0
        %639 = vmatpush1.msra.mxu0 0.0
        %640 = vmatprep.subr.mxu0 0.0
        %641 = vmatpush1.msra.mxu0 0.0
        %642 = vmatprep.subr.mxu0 0.0
        %643 = vmatpush1.msra.mxu0 0.0
        %644 = vmatprep.subr.mxu0 0.0
        %645 = vmatpush1.msra.mxu0 0.0
        %646 = vmatprep.subr.mxu0 0.0
        %647 = vmatpush1.msra.mxu0 0.0
        %648 = vmatprep.subr.mxu0 0.0
        %649 = vmatpush1.msra.mxu0 0.0
        %650 = vmatprep.subr.mxu0 0.0
        %651 = vmatpush1.msra.mxu0 0.0
        %652 = vmatprep.subr.mxu0 0.0
        %653 = vmatpush1.msra.mxu0 0.0
        %654 = vmatprep.subr.mxu0 0.0
        %655 = vmatpush1.msra.mxu0 0.0
        %656 = vmatprep.subr.mxu0 0.0
        %657 = vmatpush1.msra.mxu0 0.0
        %658 = vmatprep.subr.mxu0 0.0
        %659 = vmatpush1.msra.mxu0 0.0
        %660 = vmatprep.subr.mxu0 0.0
        %661 = vmatpush1.msra.mxu0 0.0
        %662 = vmatprep.subr.mxu0 0.0
        %663 = vmatpush1.msra.mxu0 0.0
        %664 = vmatprep.subr.mxu0 0.0
        %665 = vmatpush1.msra.mxu0 0.0
        %666 = vmatprep.subr.mxu0 0.0
        %667 = vmatpush1.msra.mxu0 0.0
        %668 = vmatprep.subr.mxu0 0.0
        %669 = vmatpush1.msra.mxu0 0.0
        %670 = vmatprep.subr.mxu0 0.0
        %671 = vmatpush1.msra.mxu0 0.0
        %672 = vmatprep.subr.mxu0 0.0
        %673 = vmatpush1.msra.mxu0 0.0
        %674 = vmatprep.subr.mxu0 0.0
        %675 = vmatpush1.msra.mxu0 0.0
        %676 = vmatprep.subr.mxu0 0.0
        %677 = vmatpush1.msra.mxu0 0.0
        %678 = vmatprep.subr.mxu0 0.0
        %679 = vmatpush1.msra.mxu0 0.0
        %680 = vmatprep.subr.mxu0 0.0
        %681 = vmatpush1.msra.mxu0 0.0
        %682 = vmatprep.subr.mxu0 0.0
        %683 = vmatpush1.msra.mxu0 0.0
        %684 = vmatprep.subr.mxu0 0.0
        %685 = vmatpush1.msra.mxu0 0.0
        %686 = vmatprep.subr.mxu0 0.0
        %687 = vmatpush1.msra.mxu0 0.0
        %688 = vmatprep.mubr.f32.mxu0 0.0
        %689 = vmatmul.mubr.f32.gmra.mrb[0].mxu0 %v622
        %v690 = vpop.f32.mrb[0].mxu0
        %v691 = vadd.f32 0.0, %v690
        %v692 = vpop.f32.mrb[0].mxu0
        %693 = vdwg.mxu0
        %694 = vst [vmem:[%s286] sm:$0x1] %v691
        %s695 = sand.u32 %s159, 1
        %s696 = scalar_lea.sflag [#allocation4], %s695
        %s697 = sand.u32 %s159, 1
        %s698 = scalar_lea.vmem [#allocation3], %s697
        // Predicated region
        $region83: #{tpu_custom_call.1} parent=77 // pred_check
          %p699 = pneg %p169
        $region84: #{tpu_custom_call.1} parent=77 // pred_check_branch
          %701 = sbr.rel (%p699) target = $region86
        $region85: #{tpu_custom_call.1} parent=77 // pred_region
          %s703 = ssub.s32 16, 16
          %704 = vsyncadd %s696, %s703
          %s705 = smul.addr %s20, 16
          %s706 = scalar_lea.hbm %s6, %s705
          %s708 = sshll.u32 %s698, 4
          %s709 = int_to_ptr.vmem [resolvable:$true] %s708
          %711 = dma.vmem_to_hbm [thread:$0]  %s709, 16, %s706, %s696
        $region86: #{tpu_custom_call.1} parent=77 // pred_fallthru
          _
      $region78: #{tpu_custom_call.1} parent=5 // pred_fallthru
        _
      %p712 = scmp.le.s32.totalorder 2, %s15
      // Predicated region
      $region87: #{tpu_custom_call.1} parent=5 // pred_check
        %p713 = pneg %p712
      $region88: #{tpu_custom_call.1} parent=5 // pred_check_branch
        %715 = sbr.rel (%p713) target = $region90
      $region89: #{tpu_custom_call.1} parent=5 // pred_region
        %s716 = ssub.s32 %s15, 2
        // Predicated region
        $region91: #{tpu_custom_call.1} parent=89 // pred_check
          %p717 = pneg %p175
        $region92: #{tpu_custom_call.1} parent=89 // pred_check_branch
          %719 = sbr.rel (%p717) target = $region94
        $region93: #{tpu_custom_call.1} parent=89 // pred_region
          %s720 = sand.u32 %s160, 1
          %s721 = scalar_lea.sflag [#allocation4], %s720
          %s722 = sand.u32 %s160, 1
          %s723 = scalar_lea.vmem [#allocation3], %s722
          %724 = dma.done %s721, 16
        $region94: #{tpu_custom_call.1} parent=89 // pred_fallthru
          _
      $region90: #{tpu_custom_call.1} parent=5 // pred_fallthru
        _
    $region6: #{tpu_custom_call.1} parent=1 // loop_footer
      %s19 = sadd.s32 1, %s15
    $region7: #{tpu_custom_call.1} parent=1 // loop_footer_branch
      %14 = sbr.rel target = $region3
    $region8: #{tpu_custom_call.1} parent=1 // loop_exit
      _
    %725 = vsyncpa [#allocation4], 1
    %s726 = scalar_lea.sflag [#allocation4], 1
    %727 = vsyncpa %s726, 1

</llo_original>
